<compile_context>
chip_gen: v7x
topology: tpu7x:2x2x1
jax: 0.10.0
libtpu: 0.0.40
codegen_flags: <defaults>
</compile_context>

<pallas_src>
import functools

import numpy as np
import jax
import jax.numpy as jnp
from jax import lax
from jax.experimental import pallas as pl
from jax.experimental.pallas import tpu as pltpu


def _nt_xent_kernel(z_ref, out_ref, *, batch_size, temperature, eps, use_bf16):
    N = batch_size
    two_n = 2 * N
    inv_t = 1.0 / temperature

    z = z_ref[...]                                        # (2N, D) f32: [z_i; z_j]

    # --- cosine-similarity normalization: z / max(||z||, eps), via rsqrt (EUP)
    # NOTE: torch.nn.CosineSimilarity clamps the *product* of norms; per-vector
    # clamping only differs for ||z|| < 1e-8 embeddings (never hit here).
    sq = jnp.sum(z * z, axis=1, keepdims=True)            # (2N, 1)
    zn = z * lax.rsqrt(jnp.maximum(sq, eps * eps))        # (2N, D)

    # --- one fused MXU matmul gives all four N x N similarity blocks ---------
    zm = zn.astype(jnp.bfloat16) if use_bf16 else zn
    S = lax.dot_general(zm, zm, (((1,), (1,)), ((), ())),
                        preferred_element_type=jnp.float32) * inv_t   # (2N, 2N)

    # scalar max -> one numerically-stable exp pass over the whole matrix
    m = jnp.max(jnp.max(S, axis=1, keepdims=True), axis=0, keepdims=True)  # (1,1)
    E = jnp.exp(S - m)                                                     # (2N,2N)

    # block-local row/col indices (VPU iota + compares, no gathers)
    R = lax.broadcasted_iota(jnp.int32, (two_n, two_n), 0)
    C = lax.broadcasted_iota(jnp.int32, (two_n, two_n), 1)
    rb = R >= N
    cb = C >= N
    rl = jnp.where(rb, R - N, R)          # row index within its N-block
    cl = jnp.where(cb, C - N, C)          # col index within its N-block
    same = rb == cb                       # ii / jj quadrants
    cross = rb != cb                      # ij / ji quadrants

    # --- CE terms for the sim_ij / sim_ji rows (2N rows, label (i+1) mod N) --
    cr_sum = jnp.sum(jnp.where(cross, E, 0.0), axis=1, keepdims=True)      # (2N,1)
    tgt_cross = jnp.where(rl + 1 == N, 0, rl + 1)
    picked_cross = jnp.sum(jnp.where(cross & (cl == tgt_cross), S, 0.0),
                           axis=1, keepdims=True)                          # (2N,1)
    term_cross = m + jnp.log(cr_sum) - picked_cross                        # (2N,1)

    # --- CE terms for the masked+reshaped sim_ii / sim_jj rows ---------------
    # Row r of sim_xx[mask].reshape(N-1, N) == [sim_xx[r, r+1:], sim_xx[r+1, :r+1]]
    # (label 0 -> picked logit = sim_xx[r, r+1]), so
    #   logsumexp(row r) = m + log( U[r] + L[r+1] )
    # with U[k] = strict-upper row sum of exp(S-m), L[k] = strict-lower row sum.
    upper = same & (cl > rl)
    lower = same & (cl < rl)
    U = jnp.sum(jnp.where(upper, E, 0.0), axis=1, keepdims=True)           # (2N,1)
    E_low = jnp.where(lower, E, 0.0)
    shift = (C == R + 1).astype(jnp.float32)        # (shift @ X)[k] == X[k+1]
    L_next = jnp.sum(
        lax.dot_general(shift, E_low, (((1,), (0,)), ((), ())),
                        preferred_element_type=jnp.float32),
        axis=1, keepdims=True)                                             # (2N,1)
    picked_diag = jnp.sum(jnp.where(same & (cl == rl + 1), S, 0.0),
                          axis=1, keepdims=True)                           # (2N,1)

    rows_v = lax.broadcasted_iota(jnp.int32, (two_n, 1), 0)
    rl_v = jnp.where(rows_v >= N, rows_v - N, rows_v)
    valid = rl_v < N - 1                           # last local row has no CE term
    denom = jnp.where(valid, U + L_next, 1.0)      # keep log() finite on dead rows
    term_masked = jnp.where(valid, m + jnp.log(denom) - picked_diag, 0.0)  # (2N,1)

    # --- mean over the 2*(2N-1) CE rows, averaged over the (a, b) pair -------
    total = jnp.sum(term_cross + term_masked, axis=0, keepdims=True)       # (1,1)
    out_ref[...] = total * (0.5 / (two_n - 1.0))


def nt_xent_loss(z_i, z_j, temperature, *, use_bf16_matmul=False):
    """Pallas-TPU NT-Xent loss matching modules/nt_xent.py forward()."""
    assert z_i.shape == z_j.shape and z_i.ndim == 2
    N, _ = z_i.shape
    # Stack once in the wrapper (layout plumbing only) so the kernel issues a
    # single (2N, D) x (D, 2N) MXU matmul for all four similarity blocks.
    z = jnp.concatenate(
        [z_i.astype(jnp.float32), z_j.astype(jnp.float32)], axis=0)

    kernel = functools.partial(
        _nt_xent_kernel, batch_size=N, temperature=float(temperature),
        eps=1e-8, use_bf16=use_bf16_matmul)

    out = pl.pallas_call(
        kernel,
        out_shape=jax.ShapeDtypeStruct((1, 1), jnp.float32),
        in_specs=[pl.BlockSpec(memory_space=pltpu.MemorySpace.VMEM)],
        out_specs=pl.BlockSpec(memory_space=pltpu.MemorySpace.VMEM),
        # Working set is a handful of (2N, 2N) f32 buffers: O(N^2).  32 MiB is
        # >= the scoped default on every generation (v5e 16, v6e 32, v7x 32).
        compiler_params=pltpu.CompilerParams(vmem_limit_bytes=32 * 1024 * 1024),
    )(z)
    return out[0, 0]


def nt_xent_ref(z_i, z_j, temperature):
    """Plain-JAX reference mirroring the PyTorch forward (for validation)."""
    N = z_i.shape[0]

    def cos(a, b):
        an = a / jnp.maximum(jnp.linalg.norm(a, axis=1, keepdims=True), 1e-8)
        bn = b / jnp.maximum(jnp.linalg.norm(b, axis=1, keepdims=True), 1e-8)
        return (an @ bn.T) / temperature

    sim_ii, sim_jj = cos(z_i, z_i), cos(z_j, z_j)
    sim_ij, sim_ji = cos(z_i, z_j), cos(z_j, z_i)

    mask = ~np.eye(N, dtype=bool)
    ia, ib = np.nonzero(mask)
    r_ii = sim_ii[ia, ib].reshape(N - 1, N)
    r_jj = sim_jj[ia, ib].reshape(N - 1, N)

    labels = np.concatenate([np.arange(1, N), np.zeros(N, np.int64)]).astype(np.int32)

    def ce(logits, lbl):
        lse = jax.scipy.special.logsumexp(logits, axis=1)
        picked = logits[np.arange(logits.shape[0]), lbl]
        return jnp.mean(lse - picked)

    loss_a = ce(jnp.concatenate([sim_ij, r_ii], axis=0), labels)
    loss_b = ce(jnp.concatenate([sim_ji, r_jj], axis=0), labels)
    return 0.5 * (loss_a + loss_b)


if __name__ == "__main__":
    N, D = 8, 32          # batch_size=8, hidden=32
    temperature = 0.5

    key = jax.random.PRNGKey(0)
    k1, k2 = jax.random.split(key)
    z_i = jax.random.normal(k1, (N, D), jnp.float32)
    z_j = jax.random.normal(k2, (N, D), jnp.float32)

    ref = nt_xent_ref(z_i, z_j, temperature)

    # f32 MXU path (bit-faithful to the f32 reference)
    loss = jax.block_until_ready(nt_xent_loss(z_i, z_j, temperature))
    assert jnp.allclose(loss, ref, atol=1e-4, rtol=1e-4), (loss, ref)

    # bf16 MXU fast path (v6e / v7x): unit-normalized inputs, f32 accumulate.
    loss_bf16 = jax.block_until_ready(
        nt_xent_loss(z_i, z_j, temperature, use_bf16_matmul=True))
    assert jnp.allclose(loss_bf16, ref, atol=5e-2, rtol=5e-2), (loss_bf16, ref)

    print("KERNEL_OK")
</pallas_src>

<mosaic_0001>
module attributes {stable_mosaic.version = 11 : i64} {
  func.func @_nt_xent_kernel(%arg0: memref<16x32xf32, #tpu.memory_space<vmem>>, %arg1: memref<1x1xf32, #tpu.memory_space<vmem>>) attributes {dimension_semantics = [], scalar_prefetch = 0 : i64, scratch_operands = 0 : i64, tpu.core_type = #tpu.core_type<tc>} {
    %c0 = arith.constant 0 : index
    %c0_0 = arith.constant 0 : index
    %0 = vector.load %arg0[%c0, %c0_0] : memref<16x32xf32, #tpu.memory_space<vmem>>, vector<16x32xf32>
    %1 = arith.mulf %0, %0 : vector<16x32xf32>
    %cst = arith.constant dense<0.000000e+00> : vector<16xf32>
    %2 = vector.multi_reduction <add>, %1, %cst [1] : vector<16x32xf32> to vector<16xf32>
    %3 = vector.shape_cast %2 : vector<16xf32> to vector<16x1xf32>
    %cst_1 = arith.constant 1.000000e-16 : f32
    %4 = vector.broadcast %cst_1 : f32 to vector<16x1xf32>
    %5 = arith.maximumf %3, %4 : vector<16x1xf32>
    %6 = math.rsqrt %5 : vector<16x1xf32>
    %7 = vector.broadcast %6 : vector<16x1xf32> to vector<16x32xf32>
    %8 = arith.mulf %0, %7 : vector<16x32xf32>
    %cst_2 = arith.constant dense<0.000000e+00> : vector<16x16xf32>
    %9 = tpu.matmul %8, %8, %cst_2 {dimension_numbers = #tpu.dot_dimension_numbers<[1], [1], [0], [0], [0, 0, 1, 0], [], []>} : vector<16x32xf32>, vector<16x32xf32>, vector<16x16xf32> -> vector<16x16xf32>
    %cst_3 = arith.constant 2.000000e+00 : f32
    %10 = vector.broadcast %cst_3 : f32 to vector<16x16xf32>
    %11 = arith.mulf %9, %10 : vector<16x16xf32>
    %cst_4 = arith.constant dense<0xFF800000> : vector<16xf32>
    %12 = vector.multi_reduction <maximumf>, %11, %cst_4 [1] : vector<16x16xf32> to vector<16xf32>
    %13 = vector.shape_cast %12 : vector<16xf32> to vector<16x1xf32>
    %cst_5 = arith.constant dense<0xFF800000> : vector<1xf32>
    %14 = vector.multi_reduction <maximumf>, %13, %cst_5 [0] : vector<16x1xf32> to vector<1xf32>
    %15 = vector.shape_cast %14 : vector<1xf32> to vector<1x1xf32>
    %16 = vector.broadcast %15 : vector<1x1xf32> to vector<16x16xf32>
    %17 = arith.subf %11, %16 : vector<16x16xf32>
    %18 = math.exp %17 : vector<16x16xf32>
    %19 = tpu.iota {dimensions = array<i32: 0>} : vector<16x16xi32>
    %20 = tpu.iota {dimensions = array<i32: 1>} : vector<16x16xi32>
    %c8_i32 = arith.constant 8 : i32
    %21 = vector.broadcast %c8_i32 : i32 to vector<16x16xi32>
    %22 = arith.cmpi sge, %19, %21 : vector<16x16xi32>
    %c8_i32_6 = arith.constant 8 : i32
    %23 = vector.broadcast %c8_i32_6 : i32 to vector<16x16xi32>
    %24 = arith.cmpi sge, %20, %23 : vector<16x16xi32>
    %c8_i32_7 = arith.constant 8 : i32
    %25 = vector.broadcast %c8_i32_7 : i32 to vector<16x16xi32>
    %26 = arith.subi %19, %25 : vector<16x16xi32>
    %27 = arith.select %22, %26, %19 : vector<16x16xi1>, vector<16x16xi32>
    %c8_i32_8 = arith.constant 8 : i32
    %28 = vector.broadcast %c8_i32_8 : i32 to vector<16x16xi32>
    %29 = arith.subi %20, %28 : vector<16x16xi32>
    %30 = arith.select %24, %29, %20 : vector<16x16xi1>, vector<16x16xi32>
    %31 = arith.xori %22, %24 : vector<16x16xi1>
    %cst_9 = arith.constant dense<true> : vector<16x16xi1>
    %32 = arith.xori %31, %cst_9 : vector<16x16xi1>
    %33 = arith.xori %22, %24 : vector<16x16xi1>
    %cst_10 = arith.constant 0.000000e+00 : f32
    %34 = vector.broadcast %cst_10 : f32 to vector<16x16xf32>
    %35 = arith.select %33, %18, %34 : vector<16x16xi1>, vector<16x16xf32>
    %cst_11 = arith.constant dense<0.000000e+00> : vector<16xf32>
    %36 = vector.multi_reduction <add>, %35, %cst_11 [1] : vector<16x16xf32> to vector<16xf32>
    %37 = vector.shape_cast %36 : vector<16xf32> to vector<16x1xf32>
    %c1_i32 = arith.constant 1 : i32
    %38 = vector.broadcast %c1_i32 : i32 to vector<16x16xi32>
    %39 = arith.addi %27, %38 : vector<16x16xi32>
    %c8_i32_12 = arith.constant 8 : i32
    %40 = vector.broadcast %c8_i32_12 : i32 to vector<16x16xi32>
    %41 = arith.cmpi eq, %39, %40 : vector<16x16xi32>
    %c1_i32_13 = arith.constant 1 : i32
    %42 = vector.broadcast %c1_i32_13 : i32 to vector<16x16xi32>
    %43 = arith.addi %27, %42 : vector<16x16xi32>
    %c0_i32 = arith.constant 0 : i32
    %44 = vector.broadcast %c0_i32 : i32 to vector<16x16xi32>
    %45 = arith.select %41, %44, %43 : vector<16x16xi1>, vector<16x16xi32>
    %46 = arith.cmpi eq, %30, %45 : vector<16x16xi32>
    %47 = arith.andi %33, %46 : vector<16x16xi1>
    %cst_14 = arith.constant 0.000000e+00 : f32
    %48 = vector.broadcast %cst_14 : f32 to vector<16x16xf32>
    %49 = arith.select %47, %11, %48 : vector<16x16xi1>, vector<16x16xf32>
    %cst_15 = arith.constant dense<0.000000e+00> : vector<16xf32>
    %50 = vector.multi_reduction <add>, %49, %cst_15 [1] : vector<16x16xf32> to vector<16xf32>
    %51 = vector.shape_cast %50 : vector<16xf32> to vector<16x1xf32>
    %52 = math.log %37 : vector<16x1xf32>
    %53 = vector.broadcast %15 : vector<1x1xf32> to vector<16x1xf32>
    %54 = arith.addf %53, %52 : vector<16x1xf32>
    %55 = arith.subf %54, %51 : vector<16x1xf32>
    %56 = arith.cmpi sgt, %30, %27 : vector<16x16xi32>
    %57 = arith.andi %32, %56 : vector<16x16xi1>
    %58 = arith.cmpi slt, %30, %27 : vector<16x16xi32>
    %59 = arith.andi %32, %58 : vector<16x16xi1>
    %cst_16 = arith.constant 0.000000e+00 : f32
    %60 = vector.broadcast %cst_16 : f32 to vector<16x16xf32>
    %61 = arith.select %57, %18, %60 : vector<16x16xi1>, vector<16x16xf32>
    %cst_17 = arith.constant dense<0.000000e+00> : vector<16xf32>
    %62 = vector.multi_reduction <add>, %61, %cst_17 [1] : vector<16x16xf32> to vector<16xf32>
    %63 = vector.shape_cast %62 : vector<16xf32> to vector<16x1xf32>
    %cst_18 = arith.constant 0.000000e+00 : f32
    %64 = vector.broadcast %cst_18 : f32 to vector<16x16xf32>
    %65 = arith.select %59, %18, %64 : vector<16x16xi1>, vector<16x16xf32>
    %c1_i32_19 = arith.constant 1 : i32
    %66 = vector.broadcast %c1_i32_19 : i32 to vector<16x16xi32>
    %67 = arith.addi %19, %66 : vector<16x16xi32>
    %68 = arith.cmpi eq, %20, %67 : vector<16x16xi32>
    %69 = arith.extui %68 : vector<16x16xi1> to vector<16x16xi32>
    %70 = arith.sitofp %69 : vector<16x16xi32> to vector<16x16xf32>
    %cst_20 = arith.constant dense<0.000000e+00> : vector<16x16xf32>
    %71 = tpu.matmul %70, %65, %cst_20 {dimension_numbers = #tpu.dot_dimension_numbers<[1], [0], [0], [1], [0, 0, 1, 1], [], []>} : vector<16x16xf32>, vector<16x16xf32>, vector<16x16xf32> -> vector<16x16xf32>
    %cst_21 = arith.constant dense<0.000000e+00> : vector<16xf32>
    %72 = vector.multi_reduction <add>, %71, %cst_21 [1] : vector<16x16xf32> to vector<16xf32>
    %73 = vector.shape_cast %72 : vector<16xf32> to vector<16x1xf32>
    %c1_i32_22 = arith.constant 1 : i32
    %74 = vector.broadcast %c1_i32_22 : i32 to vector<16x16xi32>
    %75 = arith.addi %27, %74 : vector<16x16xi32>
    %76 = arith.cmpi eq, %30, %75 : vector<16x16xi32>
    %77 = arith.andi %32, %76 : vector<16x16xi1>
    %cst_23 = arith.constant 0.000000e+00 : f32
    %78 = vector.broadcast %cst_23 : f32 to vector<16x16xf32>
    %79 = arith.select %77, %11, %78 : vector<16x16xi1>, vector<16x16xf32>
    %cst_24 = arith.constant dense<0.000000e+00> : vector<16xf32>
    %80 = vector.multi_reduction <add>, %79, %cst_24 [1] : vector<16x16xf32> to vector<16xf32>
    %81 = vector.shape_cast %80 : vector<16xf32> to vector<16x1xf32>
    %82 = tpu.iota {dimensions = array<i32: 0>} : vector<16x1xi32>
    %c8_i32_25 = arith.constant 8 : i32
    %83 = vector.broadcast %c8_i32_25 : i32 to vector<16x1xi32>
    %84 = arith.cmpi sge, %82, %83 : vector<16x1xi32>
    %c8_i32_26 = arith.constant 8 : i32
    %85 = vector.broadcast %c8_i32_26 : i32 to vector<16x1xi32>
    %86 = arith.subi %82, %85 : vector<16x1xi32>
    %87 = arith.select %84, %86, %82 : vector<16x1xi1>, vector<16x1xi32>
    %c7_i32 = arith.constant 7 : i32
    %88 = vector.broadcast %c7_i32 : i32 to vector<16x1xi32>
    %89 = arith.cmpi slt, %87, %88 : vector<16x1xi32>
    %90 = arith.addf %63, %73 : vector<16x1xf32>
    %cst_27 = arith.constant 1.000000e+00 : f32
    %91 = vector.broadcast %cst_27 : f32 to vector<16x1xf32>
    %92 = arith.select %89, %90, %91 : vector<16x1xi1>, vector<16x1xf32>
    %93 = math.log %92 : vector<16x1xf32>
    %94 = vector.broadcast %15 : vector<1x1xf32> to vector<16x1xf32>
    %95 = arith.addf %94, %93 : vector<16x1xf32>
    %96 = arith.subf %95, %81 : vector<16x1xf32>
    %cst_28 = arith.constant 0.000000e+00 : f32
    %97 = vector.broadcast %cst_28 : f32 to vector<16x1xf32>
    %98 = arith.select %89, %96, %97 : vector<16x1xi1>, vector<16x1xf32>
    %99 = arith.addf %55, %98 : vector<16x1xf32>
    %cst_29 = arith.constant dense<0.000000e+00> : vector<1xf32>
    %100 = vector.multi_reduction <add>, %99, %cst_29 [0] : vector<16x1xf32> to vector<1xf32>
    %101 = vector.shape_cast %100 : vector<1xf32> to vector<1x1xf32>
    %cst_30 = arith.constant 0.0333333351 : f32
    %102 = vector.broadcast %cst_30 : f32 to vector<1x1xf32>
    %103 = arith.mulf %101, %102 : vector<1x1xf32>
    %c0_31 = arith.constant 0 : index
    %c0_32 = arith.constant 0 : index
    %104 = vector.load %arg1[%c0_31, %c0_32] : memref<1x1xf32, #tpu.memory_space<vmem>>, vector<1x1xf32>
    tpu.vector_store %arg1[%c0_31, %c0_32], %103 {strides = array<i32>} : memref<1x1xf32, #tpu.memory_space<vmem>>, vector<1x1xf32>,
    return
  }
}

</mosaic_0001>

<llo_original>
// kernel: tpu_custom_call.1
$region0: #{tpu_custom_call.1}
  #allocation0 [shape = 'u32[]', space=smem, size = 0x4, offset = 0x4, fixed_abs, tag = 'smem constant byte address 0x4 - core index']
  #allocation1 [shape = 'u32[144,128]{1,0:T(1,128)}', space=vmem, size = 0x12000, scoped, tag = 'internal scratch']
  %s0 = inlined_call_operand.hbm [shape: f32[16,32], index: 0, kind: input, shape index: {}]
  %s1 = inlined_call_operand.hbm [shape: f32[1,1], index: 1, kind: output, shape index: {}]
  %s2 = sld [smem:[#allocation0]]
  $region18: #{tpu_custom_call.1} parent=0
    _
  %s4 = ssub.s32 1, %s2
  %s5 = scalar_select 0, %s4, %s2
  $region1: #{tpu_custom_call.1} parent=0
    #allocation2 [shape = 'u8[8192]{0}', space=vmem, size = 0x2000, scoped, tag = 'input window, operand 0, single buffered']
    #allocation3 [shape = 's32[1]{0}', space=sflag, size = 0x4, scoped, tag = 'scoped memory for tpu_custom_call.1']
    #allocation4 [shape = 's32[1]{0}', space=sflag, size = 0x4, scoped, tag = 'scoped memory for tpu_custom_call.1']
    #allocation5 [shape = 'u8[512]{0}', space=vmem, size = 0x400, scoped, tag = 'output window, operand 0, single buffered']
    %6 = vsyncpa [#allocation3], 0
    %7 = vsyncpa [#allocation4], 0
    // Predicated region
    $region2: #{tpu_custom_call.1} parent=1 // pred_check
      _
    $region3: #{tpu_custom_call.1} parent=1 // pred_check_branch
      %9 = sbr.rel (0) target = $region5
    $region4: #{tpu_custom_call.1} parent=1 // pred_region
      %s11 = ssub.s32 256, 256
      %12 = vsyncadd [#allocation3], %s11
      %s13 = sshll.u32 [#allocation2], 4
      %s14 = int_to_ptr.vmem [resolvable:$true] %s13
      %19 = dma.hbm_to_vmem [thread:$0]  %s0, 256, %s14, [#allocation3], 128, 128, 8
    $region5: #{tpu_custom_call.1} parent=1 // pred_fallthru
      _
    // Predicated region
    $region6: #{tpu_custom_call.1} parent=1 // pred_check
      _
    $region7: #{tpu_custom_call.1} parent=1 // pred_check_branch
      %21 = sbr.rel (0) target = $region9
    $region8: #{tpu_custom_call.1} parent=1 // pred_region
      %22 = dma.done [#allocation3], 256
    $region9: #{tpu_custom_call.1} parent=1 // pred_fallthru
      _
    %v23 = vld [vmem:[#allocation2] sm:$0xff]
    %v24 = vld [vmem:[#allocation2 + $0x8] sm:$0xff]
    %v25 = vmul.f32 %v23, %v23
    %v26 = vmul.f32 %v24, %v24
    %vm27 = vcmask 261120
    %v28 = vsel %vm27, %v25, 0.0
    %29 = vadd.xlane.f32.xlu0 %v28
    %v30 = vpop.xlane.xlu0 %29
    %v31 = vsel %vm27, %v26, 0.0
    %32 = vadd.xlane.f32.xlu0 %v31
    %v33 = vpop.xlane.xlu0 %32
    %v34 = vmax.f32 %v30, 1e-16
    %v35 = vmax.f32 %v33, 1e-16
    %v36 = vrsqrt.pop %v34
    %v37 = vrsqrt.pop %v35
    %v38 = vmul.f32 %v23, %v36
    %v39 = vmul.f32 %v24, %v37
    %v41 = vsel %vm27, %v38, 0
    %v44 = vsel %vm27, %v39, 0
    %46 = vmatprep.subr.mxu0 0.0
    %47 = vmatpush1.xpose.msra.mxu0 %v41
    %48 = vmatprep.subr.mxu0 0.0
    %49 = vmatpush1.xpose.msra.mxu0 %v44
    %50 = vmatprep.subr.mxu0 0.0
    %51 = vmatpush1.xpose.msra.mxu0 0.0
    %52 = vmatprep.subr.mxu0 0.0
    %53 = vmatpush1.xpose.msra.mxu0 0.0
    %54 = vmatprep.subr.mxu0 0.0
    %55 = vmatpush1.xpose.msra.mxu0 0.0
    %56 = vmatprep.subr.mxu0 0.0
    %57 = vmatpush1.xpose.msra.mxu0 0.0
    %58 = vmatprep.subr.mxu0 0.0
    %59 = vmatpush1.xpose.msra.mxu0 0.0
    %60 = vmatprep.subr.mxu0 0.0
    %61 = vmatpush1.xpose.msra.mxu0 0.0
    %62 = vmatprep.subr.mxu0 0.0
    %63 = vmatpush1.xpose.msra.mxu0 0.0
    %64 = vmatprep.subr.mxu0 0.0
    %65 = vmatpush1.xpose.msra.mxu0 0.0
    %66 = vmatprep.subr.mxu0 0.0
    %67 = vmatpush1.xpose.msra.mxu0 0.0
    %68 = vmatprep.subr.mxu0 0.0
    %69 = vmatpush1.xpose.msra.mxu0 0.0
    %70 = vmatprep.subr.mxu0 0.0
    %71 = vmatpush1.xpose.msra.mxu0 0.0
    %72 = vmatprep.subr.mxu0 0.0
    %73 = vmatpush1.xpose.msra.mxu0 0.0
    %74 = vmatprep.subr.mxu0 0.0
    %75 = vmatpush1.xpose.msra.mxu0 0.0
    %76 = vmatprep.subr.mxu0 0.0
    %77 = vmatpush1.xpose.msra.mxu0 0.0
    %78 = vmatprep.subr.mxu0 0.0
    %79 = vmatpush1.xpose.msra.mxu0 0.0
    %80 = vmatprep.subr.mxu0 0.0
    %81 = vmatpush1.xpose.msra.mxu0 0.0
    %82 = vmatprep.subr.mxu0 0.0
    %83 = vmatpush1.xpose.msra.mxu0 0.0
    %84 = vmatprep.subr.mxu0 0.0
    %85 = vmatpush1.xpose.msra.mxu0 0.0
    %86 = vmatprep.subr.mxu0 0.0
    %87 = vmatpush1.xpose.msra.mxu0 0.0
    %88 = vmatprep.subr.mxu0 0.0
    %89 = vmatpush1.xpose.msra.mxu0 0.0
    %90 = vmatprep.subr.mxu0 0.0
    %91 = vmatpush1.xpose.msra.mxu0 0.0
    %92 = vmatprep.subr.mxu0 0.0
    %93 = vmatpush1.xpose.msra.mxu0 0.0
    %94 = vmatprep.subr.mxu0 0.0
    %95 = vmatpush1.xpose.msra.mxu0 0.0
    %96 = vmatprep.subr.mxu0 0.0
    %97 = vmatpush1.xpose.msra.mxu0 0.0
    %98 = vmatprep.subr.mxu0 0.0
    %99 = vmatpush1.xpose.msra.mxu0 0.0
    %100 = vmatprep.subr.mxu0 0.0
    %101 = vmatpush1.xpose.msra.mxu0 0.0
    %102 = vmatprep.subr.mxu0 0.0
    %103 = vmatpush1.xpose.msra.mxu0 0.0
    %104 = vmatprep.subr.mxu0 0.0
    %105 = vmatpush1.xpose.msra.mxu0 0.0
    %106 = vmatprep.subr.mxu0 0.0
    %107 = vmatpush1.xpose.msra.mxu0 0.0
    %108 = vmatprep.subr.mxu0 0.0
    %109 = vmatpush1.xpose.msra.mxu0 0.0
    %110 = vmatprep.mubr.f32.mxu0 0.0
    %111 = vmatmul.mubr.f32.gmra.mrb[0].mxu0 %v41
    %v112 = vpop.f32.mrb[0].mxu0
    %v113 = vadd.f32 0.0, %v112
    %v114 = vpop.f32.mrb[0].mxu0
    %115 = vmatprep.mubr.f32.mxu0 0.0
    %116 = vmatmul.mubr.f32.gmra.mrb[0].mxu0 %v44
    %v117 = vpop.f32.mrb[0].mxu0
    %v118 = vadd.f32 0.0, %v117
    %v119 = vpop.f32.mrb[0].mxu0
    %120 = vdwg.mxu0
    %v121 = vmul.f32 %v113, 2.0
    %v122 = vmul.f32 %v118, 2.0
    %vm123 = vcmask 130048
    %v124 = vsel %vm123, %v121, -inf
    %125 = vmax.xlane.f32.xlu0 %v124
    %v126 = vpop.xlane.xlu0 %125
    %v127 = vsel %vm123, %v122, -inf
    %128 = vmax.xlane.f32.xlu0 %v127
    %v129 = vpop.xlane.xlu0 %128
    %v130 = vmax.f32 %v126, %v129
    %v131 = vrot.slane %v130, 4
    %v132 = vmax.f32 %v130, %v131
    %v133 = vrot.slane %v132, 2
    %v134 = vmax.f32 %v132, %v133
    %v135 = vrot.slane %v134, 1
    %v136 = vmax.f32 %v134, %v135
    %v137 = vsub.f32 %v121, %v136
    %v138 = vsub.f32 %v122, %v136
    %v139 = vmul.f32 %v137, 1.442695
    %v140 = vpow.pop %v139
    %v141 = vmul.f32 %v138, 1.442695
    %v142 = vpow.pop %v141
    %v143 = vlaneseq
    %v144 = vshrl.u32 %v143, 7
    %v145 = vadd.s32 %v144, 8
    %v146 = vlaneseq
    %v147 = vand.u32 %v146, 127
    %vm148 = vcmp.ge.s32.totalorder %v144, 8
    %vm149 = vcmp.ge.s32.totalorder %v145, 8
    %vm150 = vcmp.ge.s32.totalorder %v147, 8
    %v151 = vsub.s32 %v144, 8
    %v152 = vsel %vm148, %v151, %v144
    %v153 = vsel %vm149, %v144, %v145
    %v154 = vsub.s32 %v147, 8
    %v155 = vsel %vm150, %v154, %v147
    %vm156 = vmxor %vm148, %vm150
    %vm157 = vmxor %vm149, %vm150
    %vm158 = vmxor %vm156, 1
    %vm159 = vmxor %vm157, 1
    %v160 = vsel %vm156, %v140, 0.0
    %v161 = vsel %vm157, %v142, 0.0
    %v162 = vsel %vm123, %v160, 0.0
    %163 = vadd.xlane.f32.xlu0 %v162
    %v164 = vpop.xlane.xlu0 %163
    %v165 = vsel %vm123, %v161, 0.0
    %166 = vadd.xlane.f32.xlu0 %v165
    %v167 = vpop.xlane.xlu0 %166
    %v168 = vadd.s32 %v152, 1
    %v169 = vadd.s32 %v153, 1
    %vm170 = vcmp.eq.s32.totalorder %v168, 8
    %vm171 = vcmp.eq.s32.totalorder %v169, 8
    %v172 = vsel %vm170, 0, %v168
    %v173 = vsel %vm171, 0, %v169
    %vm174 = vcmp.eq.s32.totalorder %v155, %v172
    %vm175 = vcmp.eq.s32.totalorder %v155, %v173
    %vm176 = vmand %vm156, %vm174
    %vm177 = vmand %vm157, %vm175
    %v178 = vsel %vm176, %v121, 0.0
    %v179 = vsel %vm177, %v122, 0.0
    %v180 = vsel %vm123, %v178, 0.0
    %181 = vadd.xlane.f32.xlu0 %v180
    %v182 = vpop.xlane.xlu0 %181
    %v183 = vsel %vm123, %v179, 0.0
    %184 = vadd.xlane.f32.xlu0 %v183
    %v185 = vpop.xlane.xlu0 %184
    %v186 = vlog2.pop %v164
    %v187 = vmul.f32 %v186, 0.6931472
    %v188 = vlog2.pop %v167
    %v189 = vmul.f32 %v188, 0.6931472
    %v190 = vadd.f32 %v136, %v187
    %v191 = vadd.f32 %v136, %v189
    %v192 = vsub.f32 %v190, %v182
    %v193 = vsub.f32 %v191, %v185
    %vm194 = vcmp.gt.s32.totalorder %v155, %v152
    %vm195 = vcmp.gt.s32.totalorder %v155, %v153
    %vm196 = vmand %vm158, %vm194
    %vm197 = vmand %vm159, %vm195
    %vm198 = vcmp.lt.s32.totalorder %v155, %v152
    %vm199 = vcmp.lt.s32.totalorder %v155, %v153
    %vm200 = vmand %vm158, %vm198
    %vm201 = vmand %vm159, %vm199
    %v202 = vsel %vm196, %v140, 0.0
    %v203 = vsel %vm197, %v142, 0.0
    %v204 = vsel %vm123, %v202, 0.0
    %205 = vadd.xlane.f32.xlu0 %v204
    %v206 = vpop.xlane.xlu0 %205
    %v207 = vsel %vm123, %v203, 0.0
    %208 = vadd.xlane.f32.xlu0 %v207
    %v209 = vpop.xlane.xlu0 %208
    %v210 = vsel %vm200, %v140, 0.0
    %v211 = vsel %vm201, %v142, 0.0
    %v212 = vadd.s32 %v144, 1
    %v213 = vadd.s32 %v145, 1
    %vm214 = vcmp.eq.s32.totalorder %v147, %v212
    %vm215 = vcmp.eq.s32.totalorder %v147, %v213
    %v216 = vsel %vm214, 1, 0
    %v217 = vsel %vm215, 1, 0
    %v218 = vcvt.s32.f32 %v216
    %v219 = vcvt.s32.f32 %v217
    %v221 = vsel %vm123, %v218, 0
    %v224 = vsel %vm123, %v219, 0
    %226 = vmatprep.subr.mxu0 0.0
    %227 = vmatpush1.msra.mxu0 %v210
    %228 = vmatprep.subr.mxu0 0.0
    %229 = vmatpush1.msra.mxu0 %v211
    %230 = vmatprep.subr.mxu0 0.0
    %231 = vmatpush1.msra.mxu0 0.0
    %232 = vmatprep.subr.mxu0 0.0
    %233 = vmatpush1.msra.mxu0 0.0
    %234 = vmatprep.subr.mxu0 0.0
    %235 = vmatpush1.msra.mxu0 0.0
    %236 = vmatprep.subr.mxu0 0.0
    %237 = vmatpush1.msra.mxu0 0.0
    %238 = vmatprep.subr.mxu0 0.0
    %239 = vmatpush1.msra.mxu0 0.0
    %240 = vmatprep.subr.mxu0 0.0
    %241 = vmatpush1.msra.mxu0 0.0
    %242 = vmatprep.subr.mxu0 0.0
    %243 = vmatpush1.msra.mxu0 0.0
    %244 = vmatprep.subr.mxu0 0.0
    %245 = vmatpush1.msra.mxu0 0.0
    %246 = vmatprep.subr.mxu0 0.0
    %247 = vmatpush1.msra.mxu0 0.0
    %248 = vmatprep.subr.mxu0 0.0
    %249 = vmatpush1.msra.mxu0 0.0
    %250 = vmatprep.subr.mxu0 0.0
    %251 = vmatpush1.msra.mxu0 0.0
    %252 = vmatprep.subr.mxu0 0.0
    %253 = vmatpush1.msra.mxu0 0.0
    %254 = vmatprep.subr.mxu0 0.0
    %255 = vmatpush1.msra.mxu0 0.0
    %256 = vmatprep.subr.mxu0 0.0
    %257 = vmatpush1.msra.mxu0 0.0
    %258 = vmatprep.subr.mxu0 0.0
    %259 = vmatpush1.msra.mxu0 0.0
    %260 = vmatprep.subr.mxu0 0.0
    %261 = vmatpush1.msra.mxu0 0.0
    %262 = vmatprep.subr.mxu0 0.0
    %263 = vmatpush1.msra.mxu0 0.0
    %264 = vmatprep.subr.mxu0 0.0
    %265 = vmatpush1.msra.mxu0 0.0
    %266 = vmatprep.subr.mxu0 0.0
    %267 = vmatpush1.msra.mxu0 0.0
    %268 = vmatprep.subr.mxu0 0.0
    %269 = vmatpush1.msra.mxu0 0.0
    %270 = vmatprep.subr.mxu0 0.0
    %271 = vmatpush1.msra.mxu0 0.0
    %272 = vmatprep.subr.mxu0 0.0
    %273 = vmatpush1.msra.mxu0 0.0
    %274 = vmatprep.subr.mxu0 0.0
    %275 = vmatpush1.msra.mxu0 0.0
    %276 = vmatprep.subr.mxu0 0.0
    %277 = vmatpush1.msra.mxu0 0.0
    %278 = vmatprep.subr.mxu0 0.0
    %279 = vmatpush1.msra.mxu0 0.0
    %280 = vmatprep.subr.mxu0 0.0
    %281 = vmatpush1.msra.mxu0 0.0
    %282 = vmatprep.subr.mxu0 0.0
    %283 = vmatpush1.msra.mxu0 0.0
    %284 = vmatprep.subr.mxu0 0.0
    %285 = vmatpush1.msra.mxu0 0.0
    %286 = vmatprep.subr.mxu0 0.0
    %287 = vmatpush1.msra.mxu0 0.0
    %288 = vmatprep.subr.mxu0 0.0
    %289 = vmatpush1.msra.mxu0 0.0
    %290 = vmatprep.mubr.f32.mxu0 0.0
    %291 = vmatmul.mubr.f32.gmra.mrb[0].mxu0 %v221
    %v292 = vpop.f32.mrb[0].mxu0
    %v293 = vadd.f32 0.0, %v292
    %v294 = vpop.f32.mrb[0].mxu0
    %295 = vmatprep.mubr.f32.mxu0 0.0
    %296 = vmatmul.mubr.f32.gmra.mrb[0].mxu0 %v224
    %v297 = vpop.f32.mrb[0].mxu0
    %v298 = vadd.f32 0.0, %v297
    %v299 = vpop.f32.mrb[0].mxu0
    %300 = vdwg.mxu0
    %v301 = vsel %vm123, %v293, 0.0
    %302 = vadd.xlane.f32.xlu0 %v301
    %v303 = vpop.xlane.xlu0 %302
    %v304 = vsel %vm123, %v298, 0.0
    %305 = vadd.xlane.f32.xlu0 %v304
    %v306 = vpop.xlane.xlu0 %305
    %vm307 = vcmp.eq.s32.totalorder %v155, %v168
    %vm308 = vcmp.eq.s32.totalorder %v155, %v169
    %vm309 = vmand %vm158, %vm307
    %vm310 = vmand %vm159, %vm308
    %v311 = vsel %vm309, %v121, 0.0
    %v312 = vsel %vm310, %v122, 0.0
    %v313 = vsel %vm123, %v311, 0.0
    %314 = vadd.xlane.f32.xlu0 %v313
    %v315 = vpop.xlane.xlu0 %314
    %v316 = vsel %vm123, %v312, 0.0
    %317 = vadd.xlane.f32.xlu0 %v316
    %v318 = vpop.xlane.xlu0 %317
    %vm319 = vcmp.lt.s32.totalorder %v152, 7
    %vm320 = vcmp.lt.s32.totalorder %v153, 7
    %v321 = vadd.f32 %v206, %v303
    %v322 = vadd.f32 %v209, %v306
    %v323 = vsel %vm319, %v321, 1.0
    %v324 = vsel %vm320, %v322, 1.0
    %v325 = vlog2.pop %v323
    %v326 = vmul.f32 %v325, 0.6931472
    %v327 = vlog2.pop %v324
    %v328 = vmul.f32 %v327, 0.6931472
    %v329 = vadd.f32 %v136, %v326
    %v330 = vadd.f32 %v136, %v328
    %v331 = vsub.f32 %v329, %v315
    %v332 = vsub.f32 %v330, %v318
    %v333 = vsel %vm319, %v331, 0.0
    %v334 = vsel %vm320, %v332, 0.0
    %v335 = vadd.f32 %v192, %v333
    %v336 = vadd.f32 %v193, %v334
    %v337 = vadd.f32 %v335, %v336
    %v338 = vrot.slane %v337, 4
    %v339 = vadd.f32 %v337, %v338
    %v340 = vrot.slane %v339, 2
    %v341 = vadd.f32 %v339, %v340
    %v342 = vrot.slane %v341, 1
    %v343 = vadd.f32 %v341, %v342
    %v344 = vmul.f32 %v343, 0.033333335
    %vm345 = vcmask 0
    %346 = vst.msk [vmem:[#allocation5] sm:$0x1] %vm345, %v344
    // Predicated region
    $region10: #{tpu_custom_call.1} parent=1 // pred_check
      _
    $region11: #{tpu_custom_call.1} parent=1 // pred_check_branch
      %348 = sbr.rel (0) target = $region13
    $region12: #{tpu_custom_call.1} parent=1 // pred_region
      %s350 = ssub.s32 16, 16
      %351 = vsyncadd [#allocation4], %s350
      %s353 = sshll.u32 [#allocation5], 4
      %s354 = int_to_ptr.vmem [resolvable:$true] %s353
      %356 = dma.vmem_to_hbm [thread:$0]  %s354, 16, %s1, [#allocation4]
    $region13: #{tpu_custom_call.1} parent=1 // pred_fallthru
      _
    // Predicated region
    $region14: #{tpu_custom_call.1} parent=1 // pred_check
      _
    $region15: #{tpu_custom_call.1} parent=1 // pred_check_branch
      %358 = sbr.rel (0) target = $region17
    $region16: #{tpu_custom_call.1} parent=1 // pred_region
      %359 = dma.done [#allocation4], 16
    $region17: #{tpu_custom_call.1} parent=1 // pred_fallthru
      _
    %360 = vsyncpa [#allocation3], 1
    %361 = vsyncpa [#allocation4], 1

</llo_original>
